<compile_context>
chip_gen: v5e
topology: v5e:2x2
jax: 0.10.0
libtpu: 0.0.40
codegen_flags: <defaults>
</compile_context>

<pallas_src>
import jax
import jax.numpy as jnp
from jax import lax
from jax.experimental import pallas as pl
from jax.experimental.pallas import tpu as pltpu

# ----------------------------- model hyper-params -----------------------------
DENOISING_SIGMA = 0.12
LOCAL_SIGMA = 0.12
NUM_SAMPLES = 4      # model_kwargs['num_samples'] (kept small for the demo)
LOCAL_VOTE = 2       # model_kwargs['local_vote']
H = W = 16
C = 3
NUM_CLASSES = 10
D = H * W * C        # flattened image dim (768, multiple of 128)
B = NUM_SAMPLES * LOCAL_VOTE
EPS = 1e-6
NC_PAD = 16          # class axis padded to a sublane multiple (not 128 lanes)
NEG_BIG = -1e30      # effectively -inf for padded lanes (finite, no NaN risk)

# ViTImageProcessor('google/vit-base-patch16-224-in21k') statistics
IMAGE_MEAN = (0.5, 0.5, 0.5)
IMAGE_STD = (0.5, 0.5, 0.5)


# ------------------------------ fused Pallas kernel ----------------------------
def _diffsmooth_kernel(x_ref, noise_ref, wt_ref, b_ref, o_ref):
  """noise add -> clamp -> (folded normalize) -> logits -> softmax -> mean -> log-softmax."""
  x = x_ref[...]            # (1, D)  clean image in [0,1], broadcast over batch rows
  noise = noise_ref[...]    # (B, D)  n1 (shared per sample) * sigma + n2 * sigma
  wt = wt_ref[...]          # (NC_PAD, D)  istd-scaled weights, transposed, zero-padded rows
  b = b_ref[...]            # (1, NC_PAD)  mean-folded bias, NEG_BIG in padded lanes

  # TODO(synk): cifar_ddpm diffusion denoiser (pretrained UNet) has no clean Pallas
  # equivalent; it is treated as identity here.
  noisy = jnp.clip(x + noise, 0.0, 1.0)                      # (B, D)

  # Single batched matmul over all sample*vote rows; contraction on D (lane axis
  # of the transposed weights).  Normalization (x - mean) * istd is folded into
  # wt / b by the wrapper.
  logits = lax.dot_general(
      noisy, wt, (((1,), (1,)), ((), ())),
      preferred_element_type=jnp.float32) + b                # (B, NC_PAD)

  # Row-wise softmax; padded lanes carry NEG_BIG bias so they underflow to 0.
  m = jnp.max(logits, axis=-1, keepdims=True)
  e = jnp.exp(logits - m)
  probs = e / jnp.sum(e, axis=-1, keepdims=True)             # exact divide (B rows only)

  # Mean over the full sample*vote batch (keepdims).
  conf = jnp.mean(probs, axis=0, keepdims=True)              # (1, NC_PAD)

  # confidences_to_log_softmax
  conf = jnp.clip(conf, EPS, 1.0 - EPS)
  # log1p(-c) == log(1 - c) exactly within clip range; plain log lowers everywhere.
  lg = jnp.log(conf) - jnp.log(1.0 - conf)
  valid = lax.broadcasted_iota(jnp.int32, (1, NC_PAD), 1) < NUM_CLASSES
  lg = jnp.where(valid, lg, NEG_BIG)                         # keep padded lanes out
  lg = lg - jnp.max(lg, axis=-1, keepdims=True)
  lse = jnp.log(jnp.sum(jnp.exp(lg), axis=-1, keepdims=True))
  o_ref[...] = lg - lse


# ------------------------------ wrapper -----------------------------------------
def diffsmooth_forward(x_nhwc, key, w_cls, b_cls):
  """x_nhwc: [1, H, W, C] float32 in [0, 1]; key: PRNG key; w_cls: [D, NC]; b_cls: [1, NC]."""
  assert x_nhwc.shape[0] == 1, "The attack batch size should be 1"
  x_flat = x_nhwc.reshape(1, D).astype(jnp.float32)

  # Gaussian noise: n1 per sample (shared across its local votes, i.e. torch
  # repeat_interleave row order), n2 per (sample, vote).  Both sigmas applied here.
  k1, k2 = jax.random.split(key)
  n1 = jax.random.normal(k1, (NUM_SAMPLES, D), jnp.float32)
  n2 = jax.random.normal(k2, (B, D), jnp.float32)
  noise = jnp.repeat(n1, LOCAL_VOTE, axis=0) * DENOISING_SIGMA + n2 * LOCAL_SIGMA

  # Fold Normalize(mean, std) into the linear head (trace-time, exact):
  #   ((x - mean) * istd) @ W + b  ==  x @ (istd[:,None] * W) + (b - (mean*istd) @ W)
  mean_vec = jnp.tile(jnp.asarray(IMAGE_MEAN, jnp.float32), H * W)        # (D,)
  istd_vec = jnp.tile(1.0 / jnp.asarray(IMAGE_STD, jnp.float32), H * W)   # (D,)
  w_fold = w_cls * istd_vec[:, None]                                      # (D, NC)
  b_fold = b_cls - (mean_vec * istd_vec)[None, :] @ w_cls                 # (1, NC)

  # Transposed, sublane-padded weight layout: (NC_PAD, D) with D on the lane axis
  # (no 128-wide zero-lane padding shipped through HBM).  Padded bias lanes get
  # NEG_BIG so padded logits carry exactly zero probability mass.
  w_t = jnp.zeros((NC_PAD, D), jnp.float32).at[:NUM_CLASSES, :].set(w_fold.T)
  b_pad = jnp.full((1, NC_PAD), NEG_BIG, jnp.float32).at[:, :NUM_CLASSES].set(b_fold)

  # TODO(synk): Resize(224)/CenterCrop(224) of the ViT processor are omitted
  # (image kept at native size); pretrained ViTForImageClassification is replaced
  # by a deterministic linear head.  All surrounding arithmetic is exact.
  out_pad = pl.pallas_call(
      _diffsmooth_kernel,
      out_shape=jax.ShapeDtypeStruct((1, NC_PAD), jnp.float32),
      grid_spec=pltpu.PrefetchScalarGridSpec(
          num_scalar_prefetch=0,
          grid=(1,),
          in_specs=[
              pl.BlockSpec((1, D), lambda i: (0, 0)),        # clean image
              pl.BlockSpec((B, D), lambda i: (0, 0)),        # combined noise
              pl.BlockSpec((NC_PAD, D), lambda i: (0, 0)),   # folded weights (transposed)
              pl.BlockSpec((1, NC_PAD), lambda i: (0, 0)),   # folded bias
          ],
          out_specs=pl.BlockSpec((1, NC_PAD), lambda i: (0, 0)),
      ),
      # At production NUM_SAMPLES / ViT-sized D: K-tile the D axis with a logits
      # accumulator (pl.when init/finalize), tile the batch with a "parallel"
      # leading grid axis (dual TCs on v7x, per-tile distinct noise), and set
      # vmem_limit_bytes explicitly.  At this demo size one grid step is optimal
      # (launch-overhead bound).
      compiler_params=pltpu.CompilerParams(dimension_semantics=("arbitrary",)),
  )(x_flat, noise, w_t, b_pad)

  return out_pad[:, :NUM_CLASSES]


# ------------------------------ main ---------------------------------------------
if __name__ == "__main__":
  root = jax.random.PRNGKey(0)
  k_x, k_w, k_noise = jax.random.split(root, 3)

  # deterministic example input image in [0, 1], NHWC
  x = jax.random.uniform(k_x, (1, H, W, C), jnp.float32)

  # deterministic synthetic classifier parameters
  w_cls = jax.random.normal(k_w, (D, NUM_CLASSES), jnp.float32) * 0.02
  b_cls = jnp.zeros((1, NUM_CLASSES), jnp.float32)

  fwd = jax.jit(diffsmooth_forward)
  out = jax.block_until_ready(fwd(x, k_noise, w_cls, b_cls))

  assert out.shape == (1, NUM_CLASSES)
  assert bool(jnp.all(jnp.isfinite(out)))
  # log-softmax row must (approximately) exponentiate-sum to 1
  assert bool(jnp.allclose(jnp.sum(jnp.exp(out), axis=-1), 1.0, atol=1e-4))
  print("KERNEL_OK")
</pallas_src>

<mosaic_0001>
module attributes {stable_mosaic.version = 11 : i64} {
  func.func @_diffsmooth_kernel(%arg0: i32, %arg1: memref<1x768xf32, #tpu.memory_space<vmem>>, %arg2: memref<8x768xf32, #tpu.memory_space<vmem>>, %arg3: memref<16x768xf32, #tpu.memory_space<vmem>>, %arg4: memref<1x16xf32, #tpu.memory_space<vmem>>, %arg5: memref<1x16xf32, #tpu.memory_space<vmem>>) attributes {dimension_semantics = [#tpu.dimension_semantics<arbitrary>], iteration_bounds = array<i64: 1>, scalar_prefetch = 0 : i64, scratch_operands = 0 : i64, tpu.core_type = #tpu.core_type<tc>, window_params = [{pipeline_mode = #tpu.pipeline_mode<synchronous>, transform_indices = @transform_0, window_bounds = array<i64: 1, 768>}, {pipeline_mode = #tpu.pipeline_mode<synchronous>, transform_indices = @transform_1, window_bounds = array<i64: 8, 768>}, {pipeline_mode = #tpu.pipeline_mode<synchronous>, transform_indices = @transform_2, window_bounds = array<i64: 16, 768>}, {pipeline_mode = #tpu.pipeline_mode<synchronous>, transform_indices = @transform_3, window_bounds = array<i64: 1, 16>}, {pipeline_mode = #tpu.pipeline_mode<synchronous>, transform_indices = @transform_4, window_bounds = array<i64: 1, 16>}]} {
    %c0 = arith.constant 0 : index
    %c0_0 = arith.constant 0 : index
    %0 = vector.load %arg1[%c0, %c0_0] : memref<1x768xf32, #tpu.memory_space<vmem>>, vector<1x768xf32>
    %c0_1 = arith.constant 0 : index
    %c0_2 = arith.constant 0 : index
    %1 = vector.load %arg2[%c0_1, %c0_2] : memref<8x768xf32, #tpu.memory_space<vmem>>, vector<8x768xf32>
    %c0_3 = arith.constant 0 : index
    %c0_4 = arith.constant 0 : index
    %2 = vector.load %arg3[%c0_3, %c0_4] : memref<16x768xf32, #tpu.memory_space<vmem>>, vector<16x768xf32>
    %c0_5 = arith.constant 0 : index
    %c0_6 = arith.constant 0 : index
    %3 = vector.load %arg4[%c0_5, %c0_6] : memref<1x16xf32, #tpu.memory_space<vmem>>, vector<1x16xf32>
    %4 = vector.broadcast %0 : vector<1x768xf32> to vector<8x768xf32>
    %5 = arith.addf %4, %1 : vector<8x768xf32>
    %cst = arith.constant 0.000000e+00 : f32
    %cst_7 = arith.constant 1.000000e+00 : f32
    %6 = vector.broadcast %cst : f32 to vector<8x768xf32>
    %7 = arith.maximumf %6, %5 : vector<8x768xf32>
    %8 = vector.broadcast %cst_7 : f32 to vector<8x768xf32>
    %9 = arith.minimumf %8, %7 : vector<8x768xf32>
    %cst_8 = arith.constant dense<0.000000e+00> : vector<8x16xf32>
    %10 = tpu.matmul %9, %2, %cst_8 {dimension_numbers = #tpu.dot_dimension_numbers<[1], [1], [0], [0], [0, 0, 1, 0], [], []>} : vector<8x768xf32>, vector<16x768xf32>, vector<8x16xf32> -> vector<8x16xf32>
    %11 = vector.broadcast %3 : vector<1x16xf32> to vector<8x16xf32>
    %12 = arith.addf %10, %11 : vector<8x16xf32>
    %cst_9 = arith.constant dense<0xFF800000> : vector<8xf32>
    %13 = vector.multi_reduction <maximumf>, %12, %cst_9 [1] : vector<8x16xf32> to vector<8xf32>
    %14 = vector.shape_cast %13 : vector<8xf32> to vector<8x1xf32>
    %15 = vector.broadcast %14 : vector<8x1xf32> to vector<8x16xf32>
    %16 = arith.subf %12, %15 : vector<8x16xf32>
    %17 = math.exp %16 : vector<8x16xf32>
    %cst_10 = arith.constant dense<0.000000e+00> : vector<8xf32>
    %18 = vector.multi_reduction <add>, %17, %cst_10 [1] : vector<8x16xf32> to vector<8xf32>
    %19 = vector.shape_cast %18 : vector<8xf32> to vector<8x1xf32>
    %20 = vector.broadcast %19 : vector<8x1xf32> to vector<8x16xf32>
    %21 = arith.divf %17, %20 : vector<8x16xf32>
    %cst_11 = arith.constant dense<0.000000e+00> : vector<16xf32>
    %22 = vector.multi_reduction <add>, %21, %cst_11 [0] : vector<8x16xf32> to vector<16xf32>
    %23 = vector.shape_cast %22 : vector<16xf32> to vector<1x16xf32>
    %cst_12 = arith.constant 8.000000e+00 : f32
    %24 = vector.broadcast %cst_12 : f32 to vector<1x16xf32>
    %25 = arith.divf %23, %24 : vector<1x16xf32>
    %cst_13 = arith.constant 9.99999997E-7 : f32
    %cst_14 = arith.constant 0.999998986 : f32
    %26 = vector.broadcast %cst_13 : f32 to vector<1x16xf32>
    %27 = arith.maximumf %26, %25 : vector<1x16xf32>
    %28 = vector.broadcast %cst_14 : f32 to vector<1x16xf32>
    %29 = arith.minimumf %28, %27 : vector<1x16xf32>
    %30 = math.log %29 : vector<1x16xf32>
    %cst_15 = arith.constant 1.000000e+00 : f32
    %31 = vector.broadcast %cst_15 : f32 to vector<1x16xf32>
    %32 = arith.subf %31, %29 : vector<1x16xf32>
    %33 = math.log %32 : vector<1x16xf32>
    %34 = arith.subf %30, %33 : vector<1x16xf32>
    %35 = tpu.iota {dimensions = array<i32: 1>} : vector<1x16xi32>
    %c10_i32 = arith.constant 10 : i32
    %36 = vector.broadcast %c10_i32 : i32 to vector<1x16xi32>
    %37 = arith.cmpi slt, %35, %36 : vector<1x16xi32>
    %cst_16 = arith.constant -1.000000e+30 : f32
    %38 = vector.broadcast %cst_16 : f32 to vector<1x16xf32>
    %39 = arith.select %37, %34, %38 : vector<1x16xi1>, vector<1x16xf32>
    %cst_17 = arith.constant dense<0xFF800000> : vector<1xf32>
    %40 = vector.multi_reduction <maximumf>, %39, %cst_17 [1] : vector<1x16xf32> to vector<1xf32>
    %41 = vector.shape_cast %40 : vector<1xf32> to vector<1x1xf32>
    %42 = vector.broadcast %41 : vector<1x1xf32> to vector<1x16xf32>
    %43 = arith.subf %39, %42 : vector<1x16xf32>
    %44 = math.exp %43 : vector<1x16xf32>
    %cst_18 = arith.constant dense<0.000000e+00> : vector<1xf32>
    %45 = vector.multi_reduction <add>, %44, %cst_18 [1] : vector<1x16xf32> to vector<1xf32>
    %46 = vector.shape_cast %45 : vector<1xf32> to vector<1x1xf32>
    %47 = math.log %46 : vector<1x1xf32>
    %48 = vector.broadcast %47 : vector<1x1xf32> to vector<1x16xf32>
    %49 = arith.subf %43, %48 : vector<1x16xf32>
    %c0_19 = arith.constant 0 : index
    %c0_20 = arith.constant 0 : index
    %50 = vector.load %arg5[%c0_19, %c0_20] : memref<1x16xf32, #tpu.memory_space<vmem>>, vector<1x16xf32>
    tpu.vector_store %arg5[%c0_19, %c0_20], %49 {strides = array<i32>} : memref<1x16xf32, #tpu.memory_space<vmem>>, vector<1x16xf32>,
    return
  }
  func.func @transform_0(%arg0: i32) -> (i32, i32) {
    %c0_i32 = arith.constant 0 : i32
    %c0_i32_0 = arith.constant 0 : i32
    %c0_i32_1 = arith.constant 0 : i32
    return %c0_i32, %c0_i32_0 : i32, i32
  }
  func.func @transform_1(%arg0: i32) -> (i32, i32) {
    %c0_i32 = arith.constant 0 : i32
    %c0_i32_0 = arith.constant 0 : i32
    %c0_i32_1 = arith.constant 0 : i32
    return %c0_i32, %c0_i32_0 : i32, i32
  }
  func.func @transform_2(%arg0: i32) -> (i32, i32) {
    %c0_i32 = arith.constant 0 : i32
    %c0_i32_0 = arith.constant 0 : i32
    %c0_i32_1 = arith.constant 0 : i32
    return %c0_i32, %c0_i32_0 : i32, i32
  }
  func.func @transform_3(%arg0: i32) -> (i32, i32) {
    %c0_i32 = arith.constant 0 : i32
    %c0_i32_0 = arith.constant 0 : i32
    %c0_i32_1 = arith.constant 0 : i32
    return %c0_i32, %c0_i32_0 : i32, i32
  }
  func.func @transform_4(%arg0: i32) -> (i32, i32) {
    %c0_i32 = arith.constant 0 : i32
    %c0_i32_0 = arith.constant 0 : i32
    %c0_i32_1 = arith.constant 0 : i32
    return %c0_i32, %c0_i32_0 : i32, i32
  }
}

</mosaic_0001>

<llo_original>
// kernel: diffsmooth_forward.3
$region0: #{diffsmooth_forward.3}
  #allocation0 [shape = 'u32[]', space=smem, size = 0x4, offset = 0x4, fixed_abs, tag = 'smem constant byte address 0x4 - core index']
  #allocation1 [shape = 'u32[72,128]{1,0:T(1,128)}', space=vmem, size = 0x9000, scoped, tag = 'internal scratch']
  %s0 = inlined_call_operand.vmem [shape: f32[1,768], index: 0, kind: input, shape index: {}]
  %s1 = inlined_call_operand.vmem [shape: f32[8,768], index: 1, kind: input, shape index: {}]
  %s2 = inlined_call_operand.vmem [shape: f32[16,768], index: 2, kind: input, shape index: {}]
  %s3 = inlined_call_operand.vmem [shape: f32[1,16], index: 3, kind: input, shape index: {}]
  %s4 = inlined_call_operand.hbm [shape: f32[1,16], index: 4, kind: output, shape index: {}]
  %s5 = sld [smem:[#allocation0]]
  $region26: #{diffsmooth_forward.3} parent=0
    _
  %s7 = ssub.s32 1, %s5
  %s8 = scalar_select 0, %s7, %s5
  $region1: #{diffsmooth_forward.3} parent=0
    #allocation2 [shape = 'u8[512]{0}', space=vmem, size = 0x400, scoped, tag = 'output window, operand 0, single buffered']
    #allocation3 [shape = 's32[1]{0}', space=sflag, size = 0x4, scoped, tag = 'scoped memory for diffsmooth_forward.3']
    %9 = vsyncpa [#allocation3], 0
    // Predicated region
    $region2: #{diffsmooth_forward.3} parent=1 // pred_check
      _
    $region3: #{diffsmooth_forward.3} parent=1 // pred_check_branch
      %11 = sbr.rel (0) target = $region5
    $region4: #{diffsmooth_forward.3} parent=1 // pred_region
      _
    $region5: #{diffsmooth_forward.3} parent=1 // pred_fallthru
      _
    // Predicated region
    $region6: #{diffsmooth_forward.3} parent=1 // pred_check
      _
    $region7: #{diffsmooth_forward.3} parent=1 // pred_check_branch
      %13 = sbr.rel (0) target = $region9
    $region8: #{diffsmooth_forward.3} parent=1 // pred_region
      _
    $region9: #{diffsmooth_forward.3} parent=1 // pred_fallthru
      _
    // Predicated region
    $region10: #{diffsmooth_forward.3} parent=1 // pred_check
      _
    $region11: #{diffsmooth_forward.3} parent=1 // pred_check_branch
      %15 = sbr.rel (0) target = $region13
    $region12: #{diffsmooth_forward.3} parent=1 // pred_region
      _
    $region13: #{diffsmooth_forward.3} parent=1 // pred_fallthru
      _
    // Predicated region
    $region14: #{diffsmooth_forward.3} parent=1 // pred_check
      _
    $region15: #{diffsmooth_forward.3} parent=1 // pred_check_branch
      %17 = sbr.rel (0) target = $region17
    $region16: #{diffsmooth_forward.3} parent=1 // pred_region
      _
    $region17: #{diffsmooth_forward.3} parent=1 // pred_fallthru
      _
    %v18 = vld [vmem:[%s0] sm:$0x3f]
    %v19 = vld [vmem:[%s1] sm:$0xff]
    %v20 = vld [vmem:[%s1 + $0x8] sm:$0xff]
    %v21 = vld [vmem:[%s1 + $0x10] sm:$0xff]
    %v22 = vld [vmem:[%s1 + $0x18] sm:$0xff]
    %v23 = vld [vmem:[%s1 + $0x20] sm:$0xff]
    %v24 = vld [vmem:[%s1 + $0x28] sm:$0xff]
    %v25 = vld [vmem:[%s2] sm:$0xff]
    %v26 = vld [vmem:[%s2 + $0x8] sm:$0xff]
    %v27 = vld [vmem:[%s2 + $0x10] sm:$0xff]
    %v28 = vld [vmem:[%s2 + $0x18] sm:$0xff]
    %v29 = vld [vmem:[%s2 + $0x20] sm:$0xff]
    %v30 = vld [vmem:[%s2 + $0x28] sm:$0xff]
    %v31 = vld [vmem:[%s2 + $0x30] sm:$0xff]
    %v32 = vld [vmem:[%s2 + $0x38] sm:$0xff]
    %v33 = vld [vmem:[%s2 + $0x40] sm:$0xff]
    %v34 = vld [vmem:[%s2 + $0x48] sm:$0xff]
    %v35 = vld [vmem:[%s2 + $0x50] sm:$0xff]
    %v36 = vld [vmem:[%s2 + $0x58] sm:$0xff]
    %v37 = vld [vmem:[%s3] sm:$0x1]
    %v39 = vperm.slane %v18, 0
    %v40 = vperm.slane %v18, 1
    %v41 = vperm.slane %v18, 2
    %v42 = vperm.slane %v18, 3
    %v43 = vperm.slane %v18, 4
    %v44 = vperm.slane %v18, 5
    %v51 = vadd.f32 %v39, %v19
    %v52 = vadd.f32 %v40, %v20
    %v53 = vadd.f32 %v41, %v21
    %v54 = vadd.f32 %v42, %v22
    %v55 = vadd.f32 %v43, %v23
    %v56 = vadd.f32 %v44, %v24
    %v57 = vmax.f32 %v51, 0.0
    %v58 = vmax.f32 %v52, 0.0
    %v59 = vmax.f32 %v53, 0.0
    %v60 = vmax.f32 %v54, 0.0
    %v61 = vmax.f32 %v55, 0.0
    %v62 = vmax.f32 %v56, 0.0
    %v63 = vmin.f32 %v57, 1.0
    %v64 = vmin.f32 %v58, 1.0
    %v65 = vmin.f32 %v59, 1.0
    %v66 = vmin.f32 %v60, 1.0
    %v67 = vmin.f32 %v61, 1.0
    %v68 = vmin.f32 %v62, 1.0
    %v70 = vperm.slane %v37, 0
    %72 = vmatpush.xpose.msra.mxu0 0.0
    %73 = vmatpush.xpose.msra.mxu0 0.0
    %74 = vmatpush.xpose.msra.mxu0 0.0
    %75 = vmatpush.xpose.msra.mxu0 0.0
    %76 = vmatpush.xpose.msra.mxu0 0.0
    %77 = vmatpush.xpose.msra.mxu0 0.0
    %78 = vmatpush.xpose.msra.mxu0 0.0
    %79 = vmatpush.xpose.msra.mxu0 0.0
    %80 = vmatpush.xpose.msra.mxu0 0.0
    %81 = vmatpush.xpose.msra.mxu0 0.0
    %82 = vmatpush.xpose.msra.mxu0 0.0
    %83 = vmatpush.xpose.msra.mxu0 0.0
    %84 = vmatpush.xpose.msra.mxu0 0.0
    %85 = vmatpush.xpose.msra.mxu0 0.0
    %86 = vmatpush.xpose.msra.mxu0 %v31
    %87 = vmatpush.xpose.msra.mxu0 %v25
    %88 = vmatmul.f32.gmra.mxu0 %v63
    %v89 = vpop.f32.mrf.mxu0
    %v90 = vadd.f32 %v70, %v89
    %91 = vdwg.mxu0
    %92 = vmatpush.xpose.msra.mxu0 0.0
    %93 = vmatpush.xpose.msra.mxu0 0.0
    %94 = vmatpush.xpose.msra.mxu0 0.0
    %95 = vmatpush.xpose.msra.mxu0 0.0
    %96 = vmatpush.xpose.msra.mxu0 0.0
    %97 = vmatpush.xpose.msra.mxu0 0.0
    %98 = vmatpush.xpose.msra.mxu0 0.0
    %99 = vmatpush.xpose.msra.mxu0 0.0
    %100 = vmatpush.xpose.msra.mxu0 0.0
    %101 = vmatpush.xpose.msra.mxu0 0.0
    %102 = vmatpush.xpose.msra.mxu0 0.0
    %103 = vmatpush.xpose.msra.mxu0 0.0
    %104 = vmatpush.xpose.msra.mxu0 0.0
    %105 = vmatpush.xpose.msra.mxu0 0.0
    %106 = vmatpush.xpose.msra.mxu0 %v32
    %107 = vmatpush.xpose.msra.mxu0 %v26
    %108 = vmatmul.f32.gmra.mxu0 %v64
    %v109 = vpop.f32.mrf.mxu0
    %v110 = vadd.f32 %v90, %v109
    %111 = vdwg.mxu0
    %112 = vmatpush.xpose.msra.mxu0 0.0
    %113 = vmatpush.xpose.msra.mxu0 0.0
    %114 = vmatpush.xpose.msra.mxu0 0.0
    %115 = vmatpush.xpose.msra.mxu0 0.0
    %116 = vmatpush.xpose.msra.mxu0 0.0
    %117 = vmatpush.xpose.msra.mxu0 0.0
    %118 = vmatpush.xpose.msra.mxu0 0.0
    %119 = vmatpush.xpose.msra.mxu0 0.0
    %120 = vmatpush.xpose.msra.mxu0 0.0
    %121 = vmatpush.xpose.msra.mxu0 0.0
    %122 = vmatpush.xpose.msra.mxu0 0.0
    %123 = vmatpush.xpose.msra.mxu0 0.0
    %124 = vmatpush.xpose.msra.mxu0 0.0
    %125 = vmatpush.xpose.msra.mxu0 0.0
    %126 = vmatpush.xpose.msra.mxu0 %v33
    %127 = vmatpush.xpose.msra.mxu0 %v27
    %128 = vmatmul.f32.gmra.mxu0 %v65
    %v129 = vpop.f32.mrf.mxu0
    %v130 = vadd.f32 %v110, %v129
    %131 = vdwg.mxu0
    %132 = vmatpush.xpose.msra.mxu0 0.0
    %133 = vmatpush.xpose.msra.mxu0 0.0
    %134 = vmatpush.xpose.msra.mxu0 0.0
    %135 = vmatpush.xpose.msra.mxu0 0.0
    %136 = vmatpush.xpose.msra.mxu0 0.0
    %137 = vmatpush.xpose.msra.mxu0 0.0
    %138 = vmatpush.xpose.msra.mxu0 0.0
    %139 = vmatpush.xpose.msra.mxu0 0.0
    %140 = vmatpush.xpose.msra.mxu0 0.0
    %141 = vmatpush.xpose.msra.mxu0 0.0
    %142 = vmatpush.xpose.msra.mxu0 0.0
    %143 = vmatpush.xpose.msra.mxu0 0.0
    %144 = vmatpush.xpose.msra.mxu0 0.0
    %145 = vmatpush.xpose.msra.mxu0 0.0
    %146 = vmatpush.xpose.msra.mxu0 %v34
    %147 = vmatpush.xpose.msra.mxu0 %v28
    %148 = vmatmul.f32.gmra.mxu0 %v66
    %v149 = vpop.f32.mrf.mxu0
    %v150 = vadd.f32 %v130, %v149
    %151 = vdwg.mxu0
    %152 = vmatpush.xpose.msra.mxu0 0.0
    %153 = vmatpush.xpose.msra.mxu0 0.0
    %154 = vmatpush.xpose.msra.mxu0 0.0
    %155 = vmatpush.xpose.msra.mxu0 0.0
    %156 = vmatpush.xpose.msra.mxu0 0.0
    %157 = vmatpush.xpose.msra.mxu0 0.0
    %158 = vmatpush.xpose.msra.mxu0 0.0
    %159 = vmatpush.xpose.msra.mxu0 0.0
    %160 = vmatpush.xpose.msra.mxu0 0.0
    %161 = vmatpush.xpose.msra.mxu0 0.0
    %162 = vmatpush.xpose.msra.mxu0 0.0
    %163 = vmatpush.xpose.msra.mxu0 0.0
    %164 = vmatpush.xpose.msra.mxu0 0.0
    %165 = vmatpush.xpose.msra.mxu0 0.0
    %166 = vmatpush.xpose.msra.mxu0 %v35
    %167 = vmatpush.xpose.msra.mxu0 %v29
    %168 = vmatmul.f32.gmra.mxu0 %v67
    %v169 = vpop.f32.mrf.mxu0
    %v170 = vadd.f32 %v150, %v169
    %171 = vdwg.mxu0
    %172 = vmatpush.xpose.msra.mxu0 0.0
    %173 = vmatpush.xpose.msra.mxu0 0.0
    %174 = vmatpush.xpose.msra.mxu0 0.0
    %175 = vmatpush.xpose.msra.mxu0 0.0
    %176 = vmatpush.xpose.msra.mxu0 0.0
    %177 = vmatpush.xpose.msra.mxu0 0.0
    %178 = vmatpush.xpose.msra.mxu0 0.0
    %179 = vmatpush.xpose.msra.mxu0 0.0
    %180 = vmatpush.xpose.msra.mxu0 0.0
    %181 = vmatpush.xpose.msra.mxu0 0.0
    %182 = vmatpush.xpose.msra.mxu0 0.0
    %183 = vmatpush.xpose.msra.mxu0 0.0
    %184 = vmatpush.xpose.msra.mxu0 0.0
    %185 = vmatpush.xpose.msra.mxu0 0.0
    %186 = vmatpush.xpose.msra.mxu0 %v36
    %187 = vmatpush.xpose.msra.mxu0 %v30
    %188 = vmatmul.f32.gmra.mxu0 %v68
    %v189 = vpop.f32.mrf.mxu0
    %v190 = vadd.f32 %v170, %v189
    %191 = vdwg.mxu0
    %vm192 = vcmask 130048
    %v193 = vsel %vm192, %v190, -inf
    %194 = vmax.xlane.f32.xlu0 %v193
    %v195 = vpop.xlane.xlu0 %194
    %v196 = vsub.f32 %v190, %v195
    %v197 = vmul.f32 %v196, 1.442695
    %v198 = vpow.pop %v197
    %v199 = vsel %vm192, %v198, 0.0
    %200 = vadd.xlane.f32.xlu0 %v199
    %v201 = vpop.xlane.xlu0 %200
    %v202 = vrcp.pop %v201
    %v203 = vmul.f32 %v201, %v202
    %v204 = vsub.f32 1.0, %v203
    %v205 = vmul.f32 %v202, %v204
    %v206 = vadd.f32 %v202, %v205
    %vm207 = vweird.f32 %v201
    %vm208 = vweird.f32 %v202
    %vm209 = vmor %vm207, %vm208
    %v210 = vsel %vm209, %v202, %v206
    %v211 = vand.u32 2147483647, %v201
    %vm212 = vcmp.eq.f32.partialorder %v211, 8.507059e+37
    %v213 = vand.u32 %v201, 2147483648
    %v214 = vor.u32 1.1754944e-38, %v213
    %v215 = vsel %vm212, %v214, %v210
    %v216 = vmul.f32 %v198, %v215
    %v217 = vsel %vm192, %v216, 0.0
    %v218 = vrot.slane %v217, 4
    %v219 = vadd.f32 %v217, %v218
    %v220 = vrot.slane %v219, 2
    %v221 = vadd.f32 %v219, %v220
    %v222 = vrot.slane %v221, 1
    %v223 = vadd.f32 %v221, %v222
    %v224 = vrcp.pop 8.0
    %v225 = vmul.f32 8.0, %v224
    %v226 = vsub.f32 1.0, %v225
    %v227 = vmul.f32 %v224, %v226
    %v228 = vadd.f32 %v224, %v227
    %vm229 = vweird.f32 %v224
    %v230 = vsel %vm229, %v224, %v228
    %v231 = vmul.f32 %v223, %v230
    %v232 = vmax.f32 %v231, 1e-06
    %v233 = vmin.f32 %v232, 0.999999
    %v234 = vlog2.pop %v233
    %v235 = vmul.f32 %v234, 0.6931472
    %v236 = vsub.f32 1.0, %v233
    %v237 = vlog2.pop %v236
    %v238 = vmul.f32 %v237, 0.6931472
    %v239 = vsub.f32 %v235, %v238
    %v240 = vlaneseq
    %v241 = vand.u32 %v240, 127
    %vm242 = vcmp.lt.s32.totalorder %v241, 10
    %v243 = vsel %vm242, %v239, -1e+30
    %v244 = vsel %vm192, %v243, -inf
    %245 = vmax.xlane.f32.xlu0 %v244
    %v246 = vpop.xlane.xlu0 %245
    %v247 = vsub.f32 %v243, %v246
    %v248 = vmul.f32 %v247, 1.442695
    %v249 = vpow.pop %v248
    %v250 = vsel %vm192, %v249, 0.0
    %251 = vadd.xlane.f32.xlu0 %v250
    %v252 = vpop.xlane.xlu0 %251
    %v253 = vlog2.pop %v252
    %v254 = vmul.f32 %v253, 0.6931472
    %v255 = vsub.f32 %v247, %v254
    %vm256 = vcmask 122880
    %257 = vst.msk [vmem:[#allocation2] sm:$0x1] %vm256, %v255
    // Predicated region
    $region18: #{diffsmooth_forward.3} parent=1 // pred_check
      _
    $region19: #{diffsmooth_forward.3} parent=1 // pred_check_branch
      %259 = sbr.rel (0) target = $region21
    $region20: #{diffsmooth_forward.3} parent=1 // pred_region
      %261 = vsyncadd [#allocation3], 0
      %s263 = sshll.u32 [#allocation2], 4
      %s264 = int_to_ptr.vmem [resolvable:$true] %s263
      %s265 = sshll.u32 %s4, 4
      %s266 = int_to_ptr.hbm [resolvable:$true] %s265
      %268 = dma.vmem_to_hbm [thread:$0]  %s264, 16, %s266, [#allocation3]
    $region21: #{diffsmooth_forward.3} parent=1 // pred_fallthru
      _
    // Predicated region
    $region22: #{diffsmooth_forward.3} parent=1 // pred_check
      _
    $region23: #{diffsmooth_forward.3} parent=1 // pred_check_branch
      %270 = sbr.rel (0) target = $region25
    $region24: #{diffsmooth_forward.3} parent=1 // pred_region
      %272 = dma.done [#allocation3], 16
    $region25: #{diffsmooth_forward.3} parent=1 // pred_fallthru
      _
    %273 = vsyncpa [#allocation3], 1

</llo_original>
